<compile_context>
chip_gen: v7x
topology: tpu7x:2x2x1
jax: 0.10.0
libtpu: 0.0.40
codegen_flags: <defaults>
</compile_context>

<pallas_src>
import jax
import jax.numpy as jnp
from jax.experimental import pallas as pl
from jax.experimental.pallas import tpu as pltpu


def _round_up(x, m):
    return ((x + m - 1) // m) * m


def linreg_kernel(x_ref, sp_ref, w1r_ref, wspr_ref, c_ref, o_ref):
    # Both projections are N=1, so they run as VPU broadcast-multiply + lane
    # (XLU) reductions; no MXU involvement at all.
    acc = jnp.sum(x_ref[...].astype(jnp.float32) * w1r_ref[...],
                  axis=-1, keepdims=True)
    acc = acc + jnp.sum(sp_ref[...].astype(jnp.float32) * wspr_ref[...],
                        axis=-1, keepdims=True)
    o_ref[...] = acc + c_ref[0, 0]


def linear_regression_forward(x, space_encode, params, tb=1024):
    """Forward pass. Weights stored as in init_params ([in, out] layout)."""
    B, in_features = x.shape
    assert space_encode.shape == (B, 1024)
    assert params["w1"].shape == (in_features, 1), (
        "kernel implements the module default out_features=1")

    f32 = jnp.float32
    w1 = params["w1"].astype(f32)          # [in, 1]
    b1 = params["b1"].astype(f32)          # [1, 1]
    w2 = params["w2"].astype(f32)          # [1024, 512]
    b2 = params["b2"].astype(f32)          # [1, 512]
    w4 = params["w4"].astype(f32)          # [512, 128]
    b4 = params["b4"].astype(f32)          # [1, 128]
    w3 = params["w3"].astype(f32)          # [128, 1]
    b3 = params["b3"].astype(f32)          # [1, 1]
    eps = params["eps"].reshape(()).astype(f32)
    eps2 = params["eps2"].reshape(()).astype(f32)

    # ---- trace-time algebraic fold (all f32, ~0.6 MFLOP total) ----
    #   y = (1+eps)*sum(w3) * (x @ w1 + b1)
    #     + eps2 * (sp @ (w2 @ w4 @ w3) + (b2 @ w4 + b4) @ w3)
    #     + b3
    a = (1.0 + eps) * jnp.sum(w3)                         # scalar
    w1_row = (a * w1).reshape(1, in_features)             # [1, in]
    w_sp_row = (eps2 * (w2 @ (w4 @ w3))).reshape(1, 1024)  # [1, 1024]
    c = (a * b1[0, 0]
         + eps2 * ((b2 @ w4 + b4) @ w3)[0, 0]
         + b3[0, 0]).reshape(1, 1)                        # [1, 1] scalar

    # ---- batch tiling: multiple of 8 sublanes, ragged tail via cdiv grid ----
    tb = max(8, (int(tb) // 8) * 8)
    TB = min(tb, _round_up(B, 8))
    grid = (pl.cdiv(B, TB),)

    def resident(shape):  # constant index_map -> single DMA, stays in VMEM
        return pl.BlockSpec(shape, lambda i: (0, 0))

    out = pl.pallas_call(
        linreg_kernel,
        out_shape=jax.ShapeDtypeStruct((B, 1), jnp.float32),
        grid=grid,
        in_specs=[
            pl.BlockSpec((TB, in_features), lambda i: (i, 0)),  # x tile
            pl.BlockSpec((TB, 1024), lambda i: (i, 0)),         # space_encode tile
            resident((1, in_features)),                         # folded w1 row
            resident((1, 1024)),                                 # folded space row
            pl.BlockSpec(memory_space=pltpu.MemorySpace.SMEM),   # scalar constant c
        ],
        out_specs=pl.BlockSpec((TB, 1), lambda i: (i, 0)),
        compiler_params=pltpu.CompilerParams(
            dimension_semantics=("parallel",)),
    )(x, space_encode, w1_row, w_sp_row, c)

    return out


def init_params(key, in_features, out_features=1):
    """nn.Linear-style init: U(-1/sqrt(fan_in), 1/sqrt(fan_in)); weights [in, out]."""
    def linear_init(k, fan_in, fan_out):
        kw, kb = jax.random.split(k)
        bound = 1.0 / jnp.sqrt(jnp.float32(fan_in))
        w = jax.random.uniform(kw, (fan_in, fan_out), jnp.float32, -bound, bound)
        b = jax.random.uniform(kb, (1, fan_out), jnp.float32, -bound, bound)
        return w, b

    k1, k2, k3, k4 = jax.random.split(key, 4)
    w1, b1 = linear_init(k1, in_features, out_features)   # self.linear
    w2, b2 = linear_init(k2, 1024, 512)                   # self.linear2
    w4, b4 = linear_init(k3, 512, 128)                    # self.linear4
    w3, b3 = linear_init(k4, 128, 1)                      # self.linear3
    eps = jnp.zeros((1, 1), jnp.float32)                  # torch.Tensor([0])
    eps2 = jnp.zeros((1, 1), jnp.float32)
    return dict(w1=w1, b1=b1, w2=w2, b2=b2, w4=w4, b4=b4,
                w3=w3, b3=b3, eps=eps, eps2=eps2)


def reference_forward_f32(x, sp, p):
    """Pure-f32 reference, exactly the PyTorch math."""
    out = x @ p["w1"] + p["b1"]
    s = sp @ p["w2"] + p["b2"]
    s = s @ p["w4"] + p["b4"]
    z = (1.0 + p["eps"][0, 0]) * out + p["eps2"][0, 0] * s
    return z @ p["w3"] + p["b3"]


if __name__ == "__main__":
    B, IN_FEATURES = 40, 32          # small, non-multiple-of-tile batch
    TB_TEST = 16                     # small tile so the grid has several steps
                                     # (and a ragged last tile: 40 = 2*16 + 8)

    key = jax.random.PRNGKey(0)
    kx, ksp, kp = jax.random.split(key, 3)
    x = jax.random.normal(kx, (B, IN_FEATURES), jnp.float32)
    space_encode = jax.random.normal(ksp, (B, 1024), jnp.float32)
    params = init_params(kp, IN_FEATURES)

    # case 1: module's default init (eps = eps2 = 0)
    y0 = jax.block_until_ready(
        linear_regression_forward(x, space_encode, params, tb=TB_TEST))
    y0_ref = reference_forward_f32(x, space_encode, params)
    assert y0.shape == (B, 1), y0.shape
    assert jnp.allclose(y0, y0_ref, atol=1e-3, rtol=1e-3), (
        f"eps=0 case: max abs err {jnp.max(jnp.abs(y0 - y0_ref))}")

    # case 2: non-zero eps/eps2 so both paths and the algebraic fold are exercised
    params["eps"] = jnp.full((1, 1), 0.10, jnp.float32)
    params["eps2"] = jnp.full((1, 1), 0.25, jnp.float32)
    y = jax.block_until_ready(
        linear_regression_forward(x, space_encode, params, tb=TB_TEST))
    y_ref = reference_forward_f32(x, space_encode, params)
    assert y.shape == (B, 1), y.shape
    assert jnp.allclose(y, y_ref, atol=1e-3, rtol=1e-3), (
        f"f32 ref (small tile): max abs err {jnp.max(jnp.abs(y - y_ref))}")

    # case 3: default (large) tile path — TB clamps to round_up(B, 8), grid = 1
    y_big = jax.block_until_ready(
        linear_regression_forward(x, space_encode, params))
    assert jnp.allclose(y_big, y_ref, atol=1e-3, rtol=1e-3), (
        f"f32 ref (default tile): max abs err {jnp.max(jnp.abs(y_big - y_ref))}")

    print("KERNEL_OK")
</pallas_src>

<mosaic_0001>
module attributes {stable_mosaic.version = 11 : i64} {
  func.func @linreg_kernel(%arg0: i32, %arg1: memref<16x32xf32, #tpu.memory_space<vmem>>, %arg2: memref<16x1024xf32, #tpu.memory_space<vmem>>, %arg3: memref<1x32xf32, #tpu.memory_space<vmem>>, %arg4: memref<1x1024xf32, #tpu.memory_space<vmem>>, %arg5: memref<1x1xf32, #tpu.memory_space<smem>>, %arg6: memref<16x1xf32, #tpu.memory_space<vmem>>) attributes {dimension_semantics = [#tpu.dimension_semantics<parallel>], iteration_bounds = array<i64: 3>, scalar_prefetch = 0 : i64, scratch_operands = 0 : i64, tpu.core_type = #tpu.core_type<tc>, window_params = [{transform_indices = @transform_0, window_bounds = array<i64: 16, 32>}, {transform_indices = @transform_1, window_bounds = array<i64: 16, 1024>}, {pipeline_mode = #tpu.pipeline_mode<synchronous>, transform_indices = @transform_2, window_bounds = array<i64: 1, 32>}, {pipeline_mode = #tpu.pipeline_mode<synchronous>, transform_indices = @transform_3, window_bounds = array<i64: 1, 1024>}, {transform_indices = @transform_4, window_bounds = array<i64: 1, 1>}, {transform_indices = @transform_5, window_bounds = array<i64: 16, 1>}]} {
    %c0 = arith.constant 0 : index
    %c0_0 = arith.constant 0 : index
    %0 = vector.load %arg1[%c0, %c0_0] : memref<16x32xf32, #tpu.memory_space<vmem>>, vector<16x32xf32>
    %c0_1 = arith.constant 0 : index
    %c0_2 = arith.constant 0 : index
    %1 = vector.load %arg3[%c0_1, %c0_2] : memref<1x32xf32, #tpu.memory_space<vmem>>, vector<1x32xf32>
    %2 = vector.broadcast %1 : vector<1x32xf32> to vector<16x32xf32>
    %3 = arith.mulf %0, %2 : vector<16x32xf32>
    %cst = arith.constant dense<0.000000e+00> : vector<16xf32>
    %4 = vector.multi_reduction <add>, %3, %cst [1] : vector<16x32xf32> to vector<16xf32>
    %5 = vector.shape_cast %4 : vector<16xf32> to vector<16x1xf32>
    %c0_3 = arith.constant 0 : index
    %c0_4 = arith.constant 0 : index
    %6 = vector.load %arg2[%c0_3, %c0_4] : memref<16x1024xf32, #tpu.memory_space<vmem>>, vector<16x1024xf32>
    %c0_5 = arith.constant 0 : index
    %c0_6 = arith.constant 0 : index
    %7 = vector.load %arg4[%c0_5, %c0_6] : memref<1x1024xf32, #tpu.memory_space<vmem>>, vector<1x1024xf32>
    %8 = vector.broadcast %7 : vector<1x1024xf32> to vector<16x1024xf32>
    %9 = arith.mulf %6, %8 : vector<16x1024xf32>
    %cst_7 = arith.constant dense<0.000000e+00> : vector<16xf32>
    %10 = vector.multi_reduction <add>, %9, %cst_7 [1] : vector<16x1024xf32> to vector<16xf32>
    %11 = vector.shape_cast %10 : vector<16xf32> to vector<16x1xf32>
    %12 = arith.addf %5, %11 : vector<16x1xf32>
    %c0_8 = arith.constant 0 : index
    %c0_9 = arith.constant 0 : index
    %13 = memref.load %arg5[%c0_8, %c0_9] : memref<1x1xf32, #tpu.memory_space<smem>>
    %14 = vector.broadcast %13 : f32 to vector<16x1xf32>
    %15 = arith.addf %12, %14 : vector<16x1xf32>
    %c0_10 = arith.constant 0 : index
    %c0_11 = arith.constant 0 : index
    %16 = vector.load %arg6[%c0_10, %c0_11] : memref<16x1xf32, #tpu.memory_space<vmem>>, vector<16x1xf32>
    tpu.vector_store %arg6[%c0_10, %c0_11], %15 {strides = array<i32>} : memref<16x1xf32, #tpu.memory_space<vmem>>, vector<16x1xf32>,
    return
  }
  func.func @transform_0(%arg0: i32) -> (i32, i32) {
    %c0_i32 = arith.constant 0 : i32
    %c0_i32_0 = arith.constant 0 : i32
    return %arg0, %c0_i32 : i32, i32
  }
  func.func @transform_1(%arg0: i32) -> (i32, i32) {
    %c0_i32 = arith.constant 0 : i32
    %c0_i32_0 = arith.constant 0 : i32
    return %arg0, %c0_i32 : i32, i32
  }
  func.func @transform_2(%arg0: i32) -> (i32, i32) {
    %c0_i32 = arith.constant 0 : i32
    %c0_i32_0 = arith.constant 0 : i32
    %c0_i32_1 = arith.constant 0 : i32
    return %c0_i32, %c0_i32_0 : i32, i32
  }
  func.func @transform_3(%arg0: i32) -> (i32, i32) {
    %c0_i32 = arith.constant 0 : i32
    %c0_i32_0 = arith.constant 0 : i32
    %c0_i32_1 = arith.constant 0 : i32
    return %c0_i32, %c0_i32_0 : i32, i32
  }
  func.func @transform_4(%arg0: i32) -> (i32, i32) {
    %c0_i32 = arith.constant 0 : i32
    %c0_i32_0 = arith.constant 0 : i32
    %c0_i32_1 = arith.constant 0 : i32
    return %c0_i32, %c0_i32_0 : i32, i32
  }
  func.func @transform_5(%arg0: i32) -> (i32, i32) {
    %c0_i32 = arith.constant 0 : i32
    %c0_i32_0 = arith.constant 0 : i32
    return %arg0, %c0_i32 : i32, i32
  }
}

</mosaic_0001>

<llo_original>
// kernel: tpu_custom_call.1
$region0: #{tpu_custom_call.1}
  #allocation0 [shape = 'u32[]', space=smem, size = 0x4, offset = 0x4, fixed_abs, tag = 'smem constant byte address 0x4 - core index']
  #allocation1 [shape = 'u32[144,128]{1,0:T(1,128)}', space=vmem, size = 0x12000, scoped, tag = 'internal scratch']
  #allocation2 [shape = 'f32[1,1]{1,0:T(1,128)S(6)}', space=smem, size = 0x200, scoped, tag = 'scoped memory for tpu_custom_call.1']
  %s0 = inlined_call_operand.vmem [shape: f32[40,32], index: 0, kind: input, shape index: {}]
  %s1 = inlined_call_operand.hbm [shape: f32[40,1024], index: 1, kind: input, shape index: {}]
  %s2 = inlined_call_operand.vmem [shape: f32[1,32], index: 2, kind: input, shape index: {}]
  %s3 = inlined_call_operand.vmem [shape: f32[1,1024], index: 3, kind: input, shape index: {}]
  %s4 = inlined_call_operand.<no memory space> [shape: f32[1,1], index: 4, kind: input, shape index: {}]
  %s5 = inlined_call_operand.vmem [shape: f32[40,1], index: 5, kind: output, shape index: {}]
  %s6 = sld [smem:[#allocation0]]
  $region105: #{tpu_custom_call.1} parent=0
    _
  %s8 = ssub.s32 1, %s6
  %s9 = scalar_select 0, %s8, %s6
  %10 = sst [smem:[#allocation2]] %s4
  $region1: #{tpu_custom_call.1} parent=0
    #allocation3 [shape = 'u8[131072]{0}', space=vmem, size = 0x20000, scoped, tag = 'input window, operand 1']
    #allocation4 [shape = 's32[2]{0}', space=sflag, size = 0x8, scoped, tag = 'scoped memory for tpu_custom_call.1']
    #allocation5 [shape = 'u8[16384]{0}', space=vmem, size = 0x4000, scoped, tag = 'output window, operand 0']
    %11 = vsyncpa [#allocation4], 0
    %s12 = scalar_lea.sflag [#allocation4], 1
    %13 = vsyncpa %s12, 0
    loop: start=0, step=1, limit=5
    $region2: #{tpu_custom_call.1} parent=1 // loop_pre_header
      _
    $region3: #{tpu_custom_call.1} parent=1 // loop_header
      %s15 = sphi 0, %s19
      %p16 = scmp.ge.s32.totalorder %s15, 5
      %s25 = sphi 0, %s27
      %s28 = sphi 0, %s25
      %s29 = sphi 0, %s28
      %s45 = sphi 0, %s29
      %s51 = sphi 0, %s53
      %s54 = sphi 0, %s51
      %s55 = sphi 0, %s54
      %s71 = sphi 0, %s55
      %s75 = sphi 0, %s75
      %s77 = sphi 0, %s75
      %s78 = sphi 0, %s77
      %s92 = sphi 0, %s78
      %s96 = sphi 0, %s96
      %s98 = sphi 0, %s96
      %s99 = sphi 0, %s98
      %s113 = sphi 0, %s99
      %s117 = sphi 0, %s117
      %s119 = sphi 0, %s117
      %s120 = sphi 0, %s119
      %s134 = sphi 0, %s120
      %s140 = sphi 0, %s142
      %s143 = sphi 0, %s140
      %s144 = sphi 0, %s143
      %s160 = sphi 0, %s144
    $region4: #{tpu_custom_call.1} parent=1 // loop_header_branch
      %18 = sbr.rel (%p16) target = $region8
    $region5: #{tpu_custom_call.1} parent=1 // loop_body
      %s20 = ssub.s32 %s15, 1
      %s21 = ssub.s32 %s15, 2
      %s22 = sadd.s32 %s15, 1
      %s23 = ssub.s32 %s15, %s22
      %p24 = scmp.eq.s32.totalorder %s23, 0
      %s26 = sadd.s32 %s25, 1
      %s27 = scalar_select %p24, %s25, %s26
      %p30 = pneg %p24
      %p31 = scmp.eq.s32.totalorder %s15, 2
      %p32 = por %p30, %p31
      %p33 = scmp.ne.s32.totalorder %s25, %s28
      %p34 = scmp.eq.s32.totalorder %s15, 0
      %p35 = por %p33, %p34
      %p36 = scmp.ne.s32.totalorder %s25, %s28
      %p37 = scmp.eq.s32.totalorder %s20, 2
      %p38 = por %p36, %p37
      %p39 = scmp.ne.s32.totalorder %s28, %s29
      %p40 = scmp.eq.s32.totalorder %s20, 0
      %p41 = por %p39, %p40
      %p42 = scmp.ne.s32.totalorder %s28, %s29
      %p43 = scmp.eq.s32.totalorder %s21, 2
      %p44 = por %p42, %p43
      %p46 = scmp.ne.s32.totalorder %s29, %s45
      %p47 = scmp.eq.s32.totalorder %s21, 0
      %p48 = por %p46, %p47
      %s49 = ssub.s32 %s15, %s22
      %p50 = scmp.eq.s32.totalorder %s49, 0
      %s52 = sadd.s32 %s51, 1
      %s53 = scalar_select %p50, %s51, %s52
      %p56 = pneg %p50
      %p57 = scmp.eq.s32.totalorder %s15, 2
      %p58 = por %p56, %p57
      %p59 = scmp.ne.s32.totalorder %s51, %s54
      %p60 = scmp.eq.s32.totalorder %s15, 0
      %p61 = por %p59, %p60
      %p62 = scmp.ne.s32.totalorder %s51, %s54
      %p63 = scmp.eq.s32.totalorder %s20, 2
      %p64 = por %p62, %p63
      %p65 = scmp.ne.s32.totalorder %s54, %s55
      %p66 = scmp.eq.s32.totalorder %s20, 0
      %p67 = por %p65, %p66
      %p68 = scmp.ne.s32.totalorder %s54, %s55
      %p69 = scmp.eq.s32.totalorder %s21, 2
      %p70 = por %p68, %p69
      %p72 = scmp.ne.s32.totalorder %s55, %s71
      %p73 = scmp.eq.s32.totalorder %s21, 0
      %p74 = por %p72, %p73
      %s76 = sadd.s32 %s75, 1
      %p79 = scmp.eq.s32.totalorder %s15, 2
      %p80 = scmp.ne.s32.totalorder %s75, %s77
      %p81 = scmp.eq.s32.totalorder %s15, 0
      %p82 = por %p80, %p81
      %p83 = scmp.ne.s32.totalorder %s75, %s77
      %p84 = scmp.eq.s32.totalorder %s20, 2
      %p85 = por %p83, %p84
      %p86 = scmp.ne.s32.totalorder %s77, %s78
      %p87 = scmp.eq.s32.totalorder %s20, 0
      %p88 = por %p86, %p87
      %p89 = scmp.ne.s32.totalorder %s77, %s78
      %p90 = scmp.eq.s32.totalorder %s21, 2
      %p91 = por %p89, %p90
      %p93 = scmp.ne.s32.totalorder %s78, %s92
      %p94 = scmp.eq.s32.totalorder %s21, 0
      %p95 = por %p93, %p94
      %s97 = sadd.s32 %s96, 1
      %p100 = scmp.eq.s32.totalorder %s15, 2
      %p101 = scmp.ne.s32.totalorder %s96, %s98
      %p102 = scmp.eq.s32.totalorder %s15, 0
      %p103 = por %p101, %p102
      %p104 = scmp.ne.s32.totalorder %s96, %s98
      %p105 = scmp.eq.s32.totalorder %s20, 2
      %p106 = por %p104, %p105
      %p107 = scmp.ne.s32.totalorder %s98, %s99
      %p108 = scmp.eq.s32.totalorder %s20, 0
      %p109 = por %p107, %p108
      %p110 = scmp.ne.s32.totalorder %s98, %s99
      %p111 = scmp.eq.s32.totalorder %s21, 2
      %p112 = por %p110, %p111
      %p114 = scmp.ne.s32.totalorder %s99, %s113
      %p115 = scmp.eq.s32.totalorder %s21, 0
      %p116 = por %p114, %p115
      %s118 = sadd.s32 %s117, 1
      %p121 = scmp.eq.s32.totalorder %s15, 2
      %p122 = scmp.ne.s32.totalorder %s117, %s119
      %p123 = scmp.eq.s32.totalorder %s15, 0
      %p124 = por %p122, %p123
      %p125 = scmp.ne.s32.totalorder %s117, %s119
      %p126 = scmp.eq.s32.totalorder %s20, 2
      %p127 = por %p125, %p126
      %p128 = scmp.ne.s32.totalorder %s119, %s120
      %p129 = scmp.eq.s32.totalorder %s20, 0
      %p130 = por %p128, %p129
      %p131 = scmp.ne.s32.totalorder %s119, %s120
      %p132 = scmp.eq.s32.totalorder %s21, 2
      %p133 = por %p131, %p132
      %p135 = scmp.ne.s32.totalorder %s120, %s134
      %p136 = scmp.eq.s32.totalorder %s21, 0
      %p137 = por %p135, %p136
      %s138 = ssub.s32 %s15, %s22
      %p139 = scmp.eq.s32.totalorder %s138, 0
      %s141 = sadd.s32 %s140, 1
      %s142 = scalar_select %p139, %s140, %s141
      %p145 = pneg %p139
      %p146 = scmp.eq.s32.totalorder %s15, 2
      %p147 = por %p145, %p146
      %p148 = scmp.ne.s32.totalorder %s140, %s143
      %p149 = scmp.eq.s32.totalorder %s15, 0
      %p150 = por %p148, %p149
      %p151 = scmp.ne.s32.totalorder %s140, %s143
      %p152 = scmp.eq.s32.totalorder %s20, 2
      %p153 = por %p151, %p152
      %p154 = scmp.ne.s32.totalorder %s143, %s144
      %p155 = scmp.eq.s32.totalorder %s20, 0
      %p156 = por %p154, %p155
      %p157 = scmp.ne.s32.totalorder %s143, %s144
      %p158 = scmp.eq.s32.totalorder %s21, 2
      %p159 = por %p157, %p158
      %p161 = scmp.ne.s32.totalorder %s144, %s160
      %p162 = scmp.eq.s32.totalorder %s21, 0
      %p163 = por %p161, %p162
      %p164 = scmp.le.s32.totalorder 1, %s15
      %p165 = scmp.lt.s32.totalorder %s15, 4
      %p166 = pnand %p164, %p165
      %p167 = pneg %p166
      // Predicated region
      $region9: #{tpu_custom_call.1} parent=5 // pred_check
        _
      $region10: #{tpu_custom_call.1} parent=5 // pred_check_branch
        %169 = sbr.rel (%p166) target = $region12
      $region11: #{tpu_custom_call.1} parent=5 // pred_region
        %s170 = ssub.s32 %s15, 1
        // Predicated region
        $region13: #{tpu_custom_call.1} parent=11 // pred_check
          %p171 = pneg %p88
        $region14: #{tpu_custom_call.1} parent=11 // pred_check_branch
          %173 = sbr.rel (%p171) target = $region16
        $region15: #{tpu_custom_call.1} parent=11 // pred_region
          _
        $region16: #{tpu_custom_call.1} parent=11 // pred_fallthru
          _
        // Predicated region
        $region17: #{tpu_custom_call.1} parent=11 // pred_check
          %p174 = pneg %p109
        $region18: #{tpu_custom_call.1} parent=11 // pred_check_branch
          %176 = sbr.rel (%p174) target = $region20
        $region19: #{tpu_custom_call.1} parent=11 // pred_region
          _
        $region20: #{tpu_custom_call.1} parent=11 // pred_fallthru
          _
        // Predicated region
        $region21: #{tpu_custom_call.1} parent=11 // pred_check
          %p177 = pneg %p130
        $region22: #{tpu_custom_call.1} parent=11 // pred_check_branch
          %179 = sbr.rel (%p177) target = $region24
        $region23: #{tpu_custom_call.1} parent=11 // pred_region
          _
        $region24: #{tpu_custom_call.1} parent=11 // pred_fallthru
          _
      $region12: #{tpu_custom_call.1} parent=5 // pred_fallthru
        _
      %p180 = scmp.lt.s32.totalorder %s15, 3
      // Predicated region
      $region25: #{tpu_custom_call.1} parent=5 // pred_check
        %p181 = pneg %p180
      $region26: #{tpu_custom_call.1} parent=5 // pred_check_branch
        %183 = sbr.rel (%p181) target = $region28
      $region27: #{tpu_custom_call.1} parent=5 // pred_region
        // Predicated region
        $region29: #{tpu_custom_call.1} parent=27 // pred_check
          %p184 = pneg %p35
        $region30: #{tpu_custom_call.1} parent=27 // pred_check_branch
          %186 = sbr.rel (%p184) target = $region32
        $region31: #{tpu_custom_call.1} parent=27 // pred_region
          %s187 = smul.u32 2, %s15
          %s188 = ssub.s32 5, %s187
          %p189 = scmp.lt.s32.totalorder %s188, 2
          %s190 = scalar_select %p189, %s188, 2
          %s191 = smul.u32 128, %s190
          %p192 = scmp.lt.s32.totalorder %s187, 4
          %s193 = scalar_select %p192, %s187, 4
          %s194 = smul.addr %s193, 8
          %s195 = scalar_lea.vmem %s0, %s194
          %s196 = smul.u32 2, %s15
          %s197 = ssub.s32 5, %s196
          %p198 = scmp.lt.s32.totalorder %s197, 2
          %s199 = scalar_select %p198, %s197, 2
          %s200 = smul.u32 128, %s199
        $region32: #{tpu_custom_call.1} parent=27 // pred_fallthru
          _
        // Predicated region
        $region33: #{tpu_custom_call.1} parent=27 // pred_check
          %p201 = pneg %p61
        $region34: #{tpu_custom_call.1} parent=27 // pred_check_branch
          %203 = sbr.rel (%p201) target = $region36
        $region35: #{tpu_custom_call.1} parent=27 // pred_region
          %s204 = sand.u32 %s51, 1
          %s205 = scalar_lea.sflag [#allocation4], %s204
          %s206 = sand.u32 %s51, 1
          %s207 = smul.addr %s206, 128
          %s208 = scalar_lea.vmem [#allocation3], %s207
          %s209 = smul.u32 2, %s15
          %s210 = ssub.s32 5, %s209
          %p211 = scmp.lt.s32.totalorder %s210, 2
          %s212 = scalar_select %p211, %s210, 2
          %s213 = smul.u32 128, %s212
          %s214 = smul.u32 %s213, 8
          %s216 = ssub.s32 2048, %s214
          %217 = vsyncadd %s205, %s216
          %p218 = scmp.ne.s32.totalorder 0, %s214
          %s219 = smul.addr %s209, 8
          %s220 = smul.addr %s219, 128
          %s221 = scalar_lea.hbm %s1, %s220
          %s222 = smul.u32 64, %s212
          %s223 = sshll.u32 %s208, 4
          %s224 = int_to_ptr.vmem [resolvable:$true] %s223
          %s225 = sshll.u32 %s222, 4
          %229 = dma.hbm_to_vmem [thread:$0]  (%p218), %s221, %s225, %s224, %s205, 1024, 1024, 64
        $region36: #{tpu_custom_call.1} parent=27 // pred_fallthru
          _
      $region28: #{tpu_custom_call.1} parent=5 // pred_fallthru
        _
      %p230 = scmp.le.s32.totalorder 1, %s15
      %p231 = scmp.lt.s32.totalorder %s15, 4
      %p232 = pnand %p230, %p231
      %p233 = pneg %p232
      // Predicated region
      $region37: #{tpu_custom_call.1} parent=5 // pred_check
        _
      $region38: #{tpu_custom_call.1} parent=5 // pred_check_branch
        %235 = sbr.rel (%p232) target = $region40
      $region39: #{tpu_custom_call.1} parent=5 // pred_region
        %s236 = ssub.s32 %s15, 1
        %s237 = sand.u32 %s54, 1
        %s238 = scalar_lea.sflag [#allocation4], %s237
        %s239 = sand.u32 %s54, 1
        %s240 = smul.addr %s239, 128
        %s241 = scalar_lea.vmem [#allocation3], %s240
        // Predicated region
        $region41: #{tpu_custom_call.1} parent=39 // pred_check
          %p242 = pneg %p67
        $region42: #{tpu_custom_call.1} parent=39 // pred_check_branch
          %244 = sbr.rel (%p242) target = $region44
        $region43: #{tpu_custom_call.1} parent=39 // pred_region
          %245 = dma.done %s238, 2048
        $region44: #{tpu_custom_call.1} parent=39 // pred_fallthru
          _
        %s246 = smul.u32 2, %s20
        %s247 = ssub.s32 5, %s246
        %p248 = scmp.lt.s32.totalorder %s247, 2
        %s249 = scalar_select %p248, %s247, 2
        %s250 = smul.u32 128, %s249
        %p251 = scmp.lt.s32.totalorder %s246, 4
        %s252 = scalar_select %p251, %s246, 4
        %s253 = smul.addr %s252, 8
        %s254 = scalar_lea.vmem %s0, %s253
        %p255 = pneg %p41
        %p256 = pneg %p38
        %s257 = sand.u32 %s54, 1
        %s258 = scalar_lea.sflag [#allocation4], %s257
        %s259 = sand.u32 %s54, 1
        %s260 = smul.addr %s259, 128
        %s261 = scalar_lea.vmem [#allocation3], %s260
        %p262 = pneg %p67
        %p263 = pneg %p64
        %p264 = pneg %p88
        %p265 = pneg %p85
        %p266 = pneg %p109
        %p267 = pneg %p106
        %p268 = pneg %p130
        %p269 = pneg %p127
        %p270 = pneg %p156
        %p271 = pneg %p153
        %s272 = sand.u32 %s143, 1
        %s273 = sand.u32 %s143, 1
        %s274 = smul.addr %s273, 16
        %s275 = scalar_lea.vmem [#allocation5], %s274
        %s276 = smul.u32 2, %s20
        %s277 = ssub.s32 5, %s276
        %p278 = scmp.lt.s32.totalorder %s277, 2
        %s279 = scalar_select %p278, %s277, 2
        %s280 = smul.u32 128, %s279
        %p281 = scmp.lt.s32.totalorder %s276, 4
        %s282 = scalar_select %p281, %s276, 4
        %s283 = smul.addr %s282, 8
        %s284 = scalar_lea.vmem %s0, %s283
        %s285 = smul.u32 2, %s20
        %s286 = ssub.s32 5, %s285
        %p287 = scmp.lt.s32.totalorder %s286, 2
        %s288 = scalar_select %p287, %s286, 2
        %s289 = smul.u32 128, %s288
        %s290 = smul.u32 2, %s20
        %s291 = ssub.s32 5, %s290
        %p292 = scmp.lt.s32.totalorder %s291, 2
        %s293 = scalar_select %p292, %s291, 2
        %s294 = smul.u32 128, %s293
        %s295 = smul.u32 %s294, 8
        %s296 = smul.u32 2, %s20
        %s297 = ssub.s32 5, %s296
        %p298 = scmp.lt.s32.totalorder %s297, 2
        %s299 = scalar_select %p298, %s297, 2
        %s300 = smul.u32 128, %s299
        %v301 = vld [vmem:[%s284] sm:$0xff]
        %v302 = vld [vmem:[%s284 + $0x8] sm:$0xff]
        %v303 = vld [vmem:[%s2] sm:$0x1]
        %v305 = vlaneseq
        %v306 = vshrl.u32 %v305, 7
        %v307 = vsub.s32 0, %v306
        %v308 = vrot.slane %v303, %v307
        %v310 = vmul.f32 %v301, %v308
        %v311 = vmul.f32 %v302, %v308
        %vm312 = vcmask 261120
        %v313 = vsel %vm312, %v310, 0.0
        %314 = vadd.xlane.f32.xlu0 %v313
        %v315 = vpop.xlane.xlu0 %314
        %v316 = vsel %vm312, %v311, 0.0
        %317 = vadd.xlane.f32.xlu0 %v316
        %v318 = vpop.xlane.xlu0 %317
        %v319 = vld [vmem:[%s241] sm:$0xff]
        %v320 = vld [vmem:[%s241 + $0x8] sm:$0xff]
        %v321 = vld [vmem:[%s241 + $0x10] sm:$0xff]
        %v322 = vld [vmem:[%s241 + $0x18] sm:$0xff]
        %v323 = vld [vmem:[%s241 + $0x20] sm:$0xff]
        %v324 = vld [vmem:[%s241 + $0x28] sm:$0xff]
        %v325 = vld [vmem:[%s241 + $0x30] sm:$0xff]
        %v326 = vld [vmem:[%s241 + $0x38] sm:$0xff]
        %v327 = vld [vmem:[%s241 + $0x40] sm:$0xff]
        %v328 = vld [vmem:[%s241 + $0x48] sm:$0xff]
        %v329 = vld [vmem:[%s241 + $0x50] sm:$0xff]
        %v330 = vld [vmem:[%s241 + $0x58] sm:$0xff]
        %v331 = vld [vmem:[%s241 + $0x60] sm:$0xff]
        %v332 = vld [vmem:[%s241 + $0x68] sm:$0xff]
        %v333 = vld [vmem:[%s241 + $0x70] sm:$0xff]
        %v334 = vld [vmem:[%s241 + $0x78] sm:$0xff]
        %v335 = vld [vmem:[%s3] sm:$0xff]
        %v337 = vlaneseq
        %v338 = vshrl.u32 %v337, 7
        %v339 = vsub.s32 0, %v338
        %v340 = vrot.slane %v335, %v339
        %v341 = vlaneseq
        %v342 = vshrl.u32 %v341, 7
        %v343 = vsub.s32 1, %v342
        %v344 = vrot.slane %v335, %v343
        %v345 = vlaneseq
        %v346 = vshrl.u32 %v345, 7
        %v347 = vsub.s32 2, %v346
        %v348 = vrot.slane %v335, %v347
        %v349 = vlaneseq
        %v350 = vshrl.u32 %v349, 7
        %v351 = vsub.s32 3, %v350
        %v352 = vrot.slane %v335, %v351
        %v353 = vlaneseq
        %v354 = vshrl.u32 %v353, 7
        %v355 = vsub.s32 4, %v354
        %v356 = vrot.slane %v335, %v355
        %v357 = vlaneseq
        %v358 = vshrl.u32 %v357, 7
        %v359 = vsub.s32 5, %v358
        %v360 = vrot.slane %v335, %v359
        %v361 = vlaneseq
        %v362 = vshrl.u32 %v361, 7
        %v363 = vsub.s32 6, %v362
        %v364 = vrot.slane %v335, %v363
        %v365 = vlaneseq
        %v366 = vshrl.u32 %v365, 7
        %v367 = vsub.s32 7, %v366
        %v368 = vrot.slane %v335, %v367
        %v377 = vmul.f32 %v319, %v340
        %v378 = vmul.f32 %v320, %v344
        %v379 = vmul.f32 %v321, %v348
        %v380 = vmul.f32 %v322, %v352
        %v381 = vmul.f32 %v323, %v356
        %v382 = vmul.f32 %v324, %v360
        %v383 = vmul.f32 %v325, %v364
        %v384 = vmul.f32 %v326, %v368
        %v385 = vmul.f32 %v327, %v340
        %v386 = vmul.f32 %v328, %v344
        %v387 = vmul.f32 %v329, %v348
        %v388 = vmul.f32 %v330, %v352
        %v389 = vmul.f32 %v331, %v356
        %v390 = vmul.f32 %v332, %v360
        %v391 = vmul.f32 %v333, %v364
        %v392 = vmul.f32 %v334, %v368
        %v393 = vadd.f32 %v377, %v378
        %v394 = vadd.f32 %v393, %v379
        %v395 = vadd.f32 %v394, %v380
        %v396 = vadd.f32 %v395, %v381
        %v397 = vadd.f32 %v396, %v382
        %v398 = vadd.f32 %v397, %v383
        %v399 = vadd.f32 %v398, %v384
        %400 = vadd.xlane.f32.xlu0 %v399
        %v401 = vpop.xlane.xlu0 %400
        %v402 = vadd.f32 %v385, %v386
        %v403 = vadd.f32 %v402, %v387
        %v404 = vadd.f32 %v403, %v388
        %v405 = vadd.f32 %v404, %v389
        %v406 = vadd.f32 %v405, %v390
        %v407 = vadd.f32 %v406, %v391
        %v408 = vadd.f32 %v407, %v392
        %409 = vadd.xlane.f32.xlu0 %v408
        %v410 = vpop.xlane.xlu0 %409
        %v411 = vadd.f32 %v315, %v401
        %v412 = vadd.f32 %v318, %v410
        %s413 = sld [smem:[#allocation2]]
        %v414 = vstv %s413
        %v415 = vadd.f32 %v411, %v414
        %v416 = vadd.f32 %v412, %v414
        %vm417 = vcmask 7168
        %418 = vst.msk [vmem:[%s275] sm:$0xff] %vm417, %v415
        %419 = vst.msk [vmem:[%s275 + $0x8] sm:$0xff] %vm417, %v416
        %s420 = sand.u32 %s143, 1
        %s421 = sand.u32 %s143, 1
        %s422 = smul.addr %s421, 16
        %s423 = scalar_lea.vmem [#allocation5], %s422
        // Predicated region
        $region45: #{tpu_custom_call.1} parent=39 // pred_check
          %p424 = pneg %p153
        $region46: #{tpu_custom_call.1} parent=39 // pred_check_branch
          %426 = sbr.rel (%p424) target = $region48
        $region47: #{tpu_custom_call.1} parent=39 // pred_region
          %s427 = smul.u32 2, %s20
          %s428 = ssub.s32 5, %s427
          %p429 = scmp.lt.s32.totalorder %s428, 2
          %s430 = scalar_select %p429, %s428, 2
          %s431 = smul.u32 128, %s430
          %p432 = scmp.ne.s32.totalorder 0, %s431
          %s433 = smul.addr %s427, 8
          %s434 = scalar_lea.vmem %s5, %s433
          // Predicated region
          $region49: #{tpu_custom_call.1} parent=47 // pred_check
            %p435 = pneg %p432
          $region50: #{tpu_custom_call.1} parent=47 // pred_check_branch
            %437 = sbr.rel (%p435) target = $region52
          $region51: #{tpu_custom_call.1} parent=47 // pred_region
            // Predicated region
            $region53: #{tpu_custom_call.1} parent=51 // pred_check
              _
            $region54: #{tpu_custom_call.1} parent=51 // pred_check_branch
              %439 = sbr.rel (0) target = $region56
            $region55: #{tpu_custom_call.1} parent=51 // pred_region
              // Predicated region
              $region75: #{tpu_custom_call.1} parent=55 // pred_check
                _
              $region76: #{tpu_custom_call.1} parent=55 // pred_check_branch
                %490 = sbr.rel (0) target = $region78
              $region77: #{tpu_custom_call.1} parent=55 // pred_region
                %s491 = sshrl.u32 %s430, 1
                // While loop
                $region79: #{tpu_custom_call.1} parent=77 // loop_pre_header
                  _
                $region80: #{tpu_custom_call.1} parent=77 // loop_header
                  %s493 = sphi 0, %s495
                  %p494 = scmp.ge.s32.totalorder %s493, %s491
                  %s498 = sphi 0, %s507
                  %s499 = sphi %s423, %s510
                  %s500 = sphi %s434, %s511
                $region81: #{tpu_custom_call.1} parent=77 // loop_header_branch
                  %497 = sbr.rel (%p494) target = $region85
                $region82: #{tpu_custom_call.1} parent=77 // loop_body
                  %v501 = vld [vmem:[%s499] sm:$0xff]
                  %502 = vst [vmem:[%s500] sm:$0xff] %v501
                  %v503 = vld [vmem:[%s499 + $0x8] sm:$0xff]
                  %504 = vst [vmem:[%s500 + $0x8] sm:$0xff] %v503
                  %s505 = sadd.s32 1, %s498
                  %p506 = scmp.ge.s32.totalorder %s505, %s491
                  %s507 = scalar_select %p506, 0, %s505
                  %s508 = smul.u32 %s507, 16
                  %s509 = smul.u32 %s507, 16
                  %s510 = scalar_lea.vmem %s423, %s508 [#allocation5]
                  %s511 = scalar_lea.vmem %s434, %s509
                $region83: #{tpu_custom_call.1} parent=77 // loop_footer
                  %s495 = sadd.s32 %s493, 1
                $region84: #{tpu_custom_call.1} parent=77 // loop_footer_branch
                  %492 = sbr.rel target = $region80
                $region85: #{tpu_custom_call.1} parent=77 // loop_exit
                  _
                %s512 = sshrl.u32 %s430, 1
                %s513 = sand.u32 %s430, 1
                %s514 = smul.u32 %s512, 2
                %s515 = smul.u32 8, %s514
                %s516 = scalar_lea.vmem %s423, %s515 [#allocation5]
                %s517 = smul.u32 8, %s514
                %s518 = scalar_lea.vmem %s434, %s517
                // While loop
                $region86: #{tpu_custom_call.1} parent=77 // loop_pre_header
                  _
                $region87: #{tpu_custom_call.1} parent=77 // loop_header
                  %s520 = sphi 0, %s522
                  %p521 = scmp.ge.s32.totalorder %s520, %s513
                  %s525 = sphi 0, %s532
                  %s526 = sphi %s516, %s535
                  %s527 = sphi %s518, %s536
                $region88: #{tpu_custom_call.1} parent=77 // loop_header_branch
                  %524 = sbr.rel (%p521) target = $region92
                $region89: #{tpu_custom_call.1} parent=77 // loop_body
                  %v528 = vld [vmem:[%s526] sm:$0xff]
                  %529 = vst [vmem:[%s527] sm:$0xff] %v528
                  %s530 = sadd.s32 1, %s525
                  %p531 = scmp.ge.s32.totalorder %s530, %s513
                  %s532 = scalar_select %p531, 0, %s530
                  %s533 = smul.u32 %s532, 8
                  %s534 = smul.u32 %s532, 8
                  %s535 = scalar_lea.vmem %s516, %s533 [#allocation5]
                  %s536 = scalar_lea.vmem %s518, %s534
                $region90: #{tpu_custom_call.1} parent=77 // loop_footer
                  %s522 = sadd.s32 %s520, 1
                $region91: #{tpu_custom_call.1} parent=77 // loop_footer_branch
                  %519 = sbr.rel target = $region87
                $region92: #{tpu_custom_call.1} parent=77 // loop_exit
                  _
              $region78: #{tpu_custom_call.1} parent=55 // pred_fallthru
                _
              // Predicated region
              $region93: #{tpu_custom_call.1} parent=55 // pred_check
                _
              $region94: #{tpu_custom_call.1} parent=55 // pred_check_branch
                %538 = sbr.rel target = $region96
              $region95: #{tpu_custom_call.1} parent=55 // pred_region
                _
              $region96: #{tpu_custom_call.1} parent=55 // pred_fallthru
                _
            $region56: #{tpu_custom_call.1} parent=51 // pred_fallthru
              _
            // Predicated region
            $region57: #{tpu_custom_call.1} parent=51 // pred_check
              _
            $region58: #{tpu_custom_call.1} parent=51 // pred_check_branch
              %441 = sbr.rel target = $region60
            $region59: #{tpu_custom_call.1} parent=51 // pred_region
              %s443 = sshrl.u32 %s430, 1
              // While loop
              $region61: #{tpu_custom_call.1} parent=59 // loop_pre_header
                _
              $region62: #{tpu_custom_call.1} parent=59 // loop_header
                %s445 = sphi 0, %s447
                %p446 = scmp.ge.s32.totalorder %s445, %s443
                %s450 = sphi 0, %s459
                %s451 = sphi %s423, %s462
                %s452 = sphi %s434, %s463
              $region63: #{tpu_custom_call.1} parent=59 // loop_header_branch
                %449 = sbr.rel (%p446) target = $region67
              $region64: #{tpu_custom_call.1} parent=59 // loop_body
                %v453 = vld [vmem:[%s451] sm:$0xff]
                %454 = vst [vmem:[%s452] sm:$0xff] %v453
                %v455 = vld [vmem:[%s451 + $0x8] sm:$0xff]
                %456 = vst [vmem:[%s452 + $0x8] sm:$0xff] %v455
                %s457 = sadd.s32 1, %s450
                %p458 = scmp.ge.s32.totalorder %s457, %s443
                %s459 = scalar_select %p458, 0, %s457
                %s460 = smul.u32 %s459, 16
                %s461 = smul.u32 %s459, 16
                %s462 = scalar_lea.vmem %s423, %s460 [#allocation5]
                %s463 = scalar_lea.vmem %s434, %s461
              $region65: #{tpu_custom_call.1} parent=59 // loop_footer
                %s447 = sadd.s32 %s445, 1
              $region66: #{tpu_custom_call.1} parent=59 // loop_footer_branch
                %444 = sbr.rel target = $region62
              $region67: #{tpu_custom_call.1} parent=59 // loop_exit
                _
              %s464 = sshrl.u32 %s430, 1
              %s465 = sand.u32 %s430, 1
              %s466 = smul.u32 %s464, 2
              %s467 = smul.u32 8, %s466
              %s468 = scalar_lea.vmem %s423, %s467 [#allocation5]
              %s469 = smul.u32 8, %s466
              %s470 = scalar_lea.vmem %s434, %s469
              // While loop
              $region68: #{tpu_custom_call.1} parent=59 // loop_pre_header
                _
              $region69: #{tpu_custom_call.1} parent=59 // loop_header
                %s472 = sphi 0, %s474
                %p473 = scmp.ge.s32.totalorder %s472, %s465
                %s477 = sphi 0, %s484
                %s478 = sphi %s468, %s487
                %s479 = sphi %s470, %s488
              $region70: #{tpu_custom_call.1} parent=59 // loop_header_branch
                %476 = sbr.rel (%p473) target = $region74
              $region71: #{tpu_custom_call.1} parent=59 // loop_body
                %v480 = vld [vmem:[%s478] sm:$0xff]
                %481 = vst [vmem:[%s479] sm:$0xff] %v480
                %s482 = sadd.s32 1, %s477
                %p483 = scmp.ge.s32.totalorder %s482, %s465
                %s484 = scalar_select %p483, 0, %s482
                %s485 = smul.u32 %s484, 8
                %s486 = smul.u32 %s484, 8
                %s487 = scalar_lea.vmem %s468, %s485 [#allocation5]
                %s488 = scalar_lea.vmem %s470, %s486
              $region72: #{tpu_custom_call.1} parent=59 // loop_footer
                %s474 = sadd.s32 %s472, 1
              $region73: #{tpu_custom_call.1} parent=59 // loop_footer_branch
                %471 = sbr.rel target = $region69
              $region74: #{tpu_custom_call.1} parent=59 // loop_exit
                _
            $region60: #{tpu_custom_call.1} parent=51 // pred_fallthru
              _
          $region52: #{tpu_custom_call.1} parent=47 // pred_fallthru
            _
          %539 = vnop
        $region48: #{tpu_custom_call.1} parent=39 // pred_fallthru
          _
      $region40: #{tpu_custom_call.1} parent=5 // pred_fallthru
        _
      %p540 = scmp.le.s32.totalorder 2, %s15
      // Predicated region
      $region97: #{tpu_custom_call.1} parent=5 // pred_check
        %p541 = pneg %p540
      $region98: #{tpu_custom_call.1} parent=5 // pred_check_branch
        %543 = sbr.rel (%p541) target = $region100
      $region99: #{tpu_custom_call.1} parent=5 // pred_region
        %s544 = ssub.s32 %s15, 2
        // Predicated region
        $region101: #{tpu_custom_call.1} parent=99 // pred_check
          %p545 = pneg %p159
        $region102: #{tpu_custom_call.1} parent=99 // pred_check_branch
          %547 = sbr.rel (%p545) target = $region104
        $region103: #{tpu_custom_call.1} parent=99 // pred_region
          %s548 = sand.u32 %s144, 1
          %s549 = sand.u32 %s144, 1
          %s550 = smul.addr %s549, 16
          %s551 = scalar_lea.vmem [#allocation5], %s550
        $region104: #{tpu_custom_call.1} parent=99 // pred_fallthru
          _
      $region100: #{tpu_custom_call.1} parent=5 // pred_fallthru
        _
    $region6: #{tpu_custom_call.1} parent=1 // loop_footer
      %s19 = sadd.s32 1, %s15
    $region7: #{tpu_custom_call.1} parent=1 // loop_footer_branch
      %14 = sbr.rel target = $region3
    $region8: #{tpu_custom_call.1} parent=1 // loop_exit
      _
    %552 = vsyncpa [#allocation4], 1
    %s553 = scalar_lea.sflag [#allocation4], 1
    %554 = vsyncpa %s553, 1

</llo_original>
